<compile_context>
chip_gen: v5e
topology: v5e:2x2
jax: 0.10.0
libtpu: 0.0.40
codegen_flags: <defaults>
</compile_context>

<pallas_src>
import jax
import jax.numpy as jnp
from jax.experimental import pallas as pl
from jax.experimental.pallas import tpu as pltpu


def _round_up(x, m):
    return ((x + m - 1) // m) * m


def _round_down(x, m):
    return (x // m) * m


def _cdiv(a, b):
    return (a + b - 1) // b


def _vmem_limit_bytes():
    """Generation-aware scoped-VMEM limit (v5e/v6e: 128 MiB phys, v7x: 64 MiB)."""
    cap = 64 * 1024 * 1024
    try:
        info = pltpu.get_tpu_info()
        cap = int(getattr(info, "vmem_capacity_bytes", cap))
    except Exception:
        pass
    # Leave ~25% headroom for Mosaic scratch/spills; never request > 96 MiB.
    return min((cap * 3) // 4, 96 * 1024 * 1024)


def _make_kernel(F, tile_f, need_mask):
    def kernel(x_ref, w_ref, c_ref, o_ref, acc_ref):
        # x_ref  : (TILE_B, TILE_F) VMEM  -- streamed batch-row tile of X
        # w_ref  : (1, TILE_F)      VMEM  -- effective-weight slice
        # c_ref  : (1,)             SMEM  -- scalar constant bl + <bp, Wl_vo.sum(0)>
        # o_ref  : (1, TILE_B)      VMEM  -- lane-dense output row (resident over F axis)
        # acc_ref: (1, TILE_B) f32  VMEM  -- partial-sum accumulator
        j = pl.program_id(1)

        @pl.when(j == 0)
        def _init():
            acc_ref[...] = jnp.zeros_like(acc_ref)

        # VPU broadcast-mul + XLU lane reduce (hidden under the tile DMA).
        prod = x_ref[...].astype(jnp.float32) * w_ref[...].astype(jnp.float32)
        if need_mask:
            col = j * tile_f + jax.lax.broadcasted_iota(jnp.int32, prod.shape, 1)
            prod = jnp.where(col < F, prod, 0.0)
        part = jnp.sum(prod, axis=-1, keepdims=True)      # (TILE_B, 1)
        acc_ref[...] += part.T                             # column -> lane-dense row

        @pl.when(j == pl.num_programs(1) - 1)
        def _finalize():
            o_ref[...] = (acc_ref[...] + c_ref[0]).astype(o_ref.dtype)

    return kernel


def post_decoder(X, Wp, bp, Wl, bl, num_var):
    """Pallas implementation of Post_Decoder.forward.

    X  : (B, num_var, in_dim) if num_var else (B, in_dim)
    Wp : (out_dim, in_dim)      proj.weight (PyTorch layout)
    bp : (out_dim,)             proj.bias
    Wl : (1, num_var*out_dim)   linear.weight (or (1, out_dim) if num_var is None)
    bl : (1,)                   linear.bias
    Returns (B, 1), matching the PyTorch module.
    """
    V = int(num_var) if num_var else 1
    B = X.shape[0]
    in_dim = X.shape[-1]
    out_dim = Wp.shape[0]
    F = V * in_dim

    # ---- algebraically collapse the two linears (second one outputs a scalar) ----
    wl_vo = Wl.reshape(V, out_dim).astype(jnp.float32)                 # (V, out_dim)
    weff = (wl_vo @ Wp.astype(jnp.float32)).reshape(1, F)              # (1, V*in_dim)
    const = (bl.astype(jnp.float32)
             + jnp.dot(wl_vo.sum(axis=0), bp.astype(jnp.float32))).reshape(1)

    # ---- flat, un-copied view of X (no host-side padding of the big operand) ----
    x2d = X.reshape(B, F)
    itemsize = x2d.dtype.itemsize

    # ---- generation/dtype-aware tile sizing ----
    vmem_limit = _vmem_limit_bytes()
    budget = vmem_limit // 2                       # VMEM spent on the streamed x tiles
    f_lane = _round_up(F, 128)                     # lane-padded width of the x block in VMEM
    # per batch row: double-buffered x block + f32 product temp + (8,128)-padded
    # row-sum column (all lane-padded VMEM footprints)
    row_cost = 2 * f_lane * itemsize + f_lane * 4 + 128 * 4

    tile_b = _round_down(budget // row_cost, 128)
    if tile_b >= 128:
        tile_f, n_f = F, 1                         # common case: whole F in one block
    else:
        # F too large for even a 128-row double-buffered block: tile the feature
        # axis ("arbitrary", last grid dim) and accumulate partial sums.
        tile_b = 128
        col_cost = 128 * (2 * itemsize + 4)        # per feature column, 128 rows
        tile_f = max(_round_down(budget // col_cost, 128), 128)
        n_f = _cdiv(F, tile_f)

    tile_b = min(tile_b, _round_up(B, 128))
    if _round_up(B, 128) >= 256:
        # keep >= 2 batch blocks so v7x megacore can shard the "parallel" axis
        tile_b = min(tile_b, _round_up(_cdiv(B, 2), 128))
    tile_b = max(tile_b, 128)

    n_b = _cdiv(B, tile_b)
    need_mask = (n_f > 1) and (F % tile_f != 0)

    kernel = _make_kernel(F, tile_f, need_mask)

    out = pl.pallas_call(
        kernel,
        out_shape=jax.ShapeDtypeStruct((1, n_b * tile_b), X.dtype),
        grid=(n_b, n_f),
        in_specs=[
            pl.BlockSpec((tile_b, tile_f), lambda i, j: (i, j)),   # X row tile (pipelined)
            pl.BlockSpec((1, tile_f), lambda i, j: (0, j)),        # Weff slice
            pl.BlockSpec(memory_space=pltpu.MemorySpace.SMEM),     # scalar constant
        ],
        out_specs=pl.BlockSpec((1, tile_b), lambda i, j: (0, i)),  # lane-dense output
        scratch_shapes=[pltpu.VMEM((1, tile_b), jnp.float32)],
        compiler_params=pltpu.CompilerParams(
            dimension_semantics=("parallel", "arbitrary"),
            vmem_limit_bytes=vmem_limit,
        ),
        cost_estimate=pl.CostEstimate(
            flops=2 * B * F,
            bytes_accessed=B * F * itemsize + F * 4 + B * itemsize + 4,
            transcendentals=0,
        ),
    )(x2d, weff, const)

    return out[0, :B].reshape(B, 1)


def post_decoder_ref(X, Wp, bp, Wl, bl, num_var):
    """Pure-JAX reference mirroring the PyTorch forward."""
    Xv = X if num_var else X[:, None, :]
    h = jnp.einsum('bvi,oi->bvo', Xv, Wp) + bp
    h = h.reshape(h.shape[0], -1)
    return h @ Wl.T + bl


if __name__ == "__main__":
    B, num_var, in_dim, out_dim = 2, 4, 8, 8

    key = jax.random.PRNGKey(0)
    kx, kwp, kbp, kwl, kbl = jax.random.split(key, 5)

    # Deterministic parameter init (PyTorch-Linear-style uniform bounds).
    X = jax.random.normal(kx, (B, num_var, in_dim), dtype=jnp.float32)
    bnd_p = 1.0 / (in_dim ** 0.5)
    Wp = jax.random.uniform(kwp, (out_dim, in_dim), jnp.float32, -bnd_p, bnd_p)
    bp = jax.random.uniform(kbp, (out_dim,), jnp.float32, -bnd_p, bnd_p)
    bnd_l = 1.0 / ((num_var * out_dim) ** 0.5)
    Wl = jax.random.uniform(kwl, (1, num_var * out_dim), jnp.float32, -bnd_l, bnd_l)
    bl = jax.random.uniform(kbl, (1,), jnp.float32, -bnd_l, bnd_l)

    out = post_decoder(X, Wp, bp, Wl, bl, num_var)
    out = jax.block_until_ready(out)

    ref = post_decoder_ref(X, Wp, bp, Wl, bl, num_var)
    assert out.shape == (B, 1)
    assert jnp.allclose(out, ref, atol=1e-4, rtol=1e-4), (out, ref)

    print("KERNEL_OK")
</pallas_src>

<mosaic_0001>
module attributes {stable_mosaic.version = 11 : i64} {
  func.func @kernel(%arg0: i32, %arg1: i32, %arg2: memref<128x32xf32, #tpu.memory_space<vmem>>, %arg3: memref<1x32xf32, #tpu.memory_space<vmem>>, %arg4: memref<1xf32, #tpu.memory_space<smem>>, %arg5: memref<1x128xf32, #tpu.memory_space<vmem>>, %arg6: memref<1x128xf32, #tpu.memory_space<vmem>>) attributes {dimension_semantics = [#tpu.dimension_semantics<parallel>, #tpu.dimension_semantics<arbitrary>], iteration_bounds = array<i64: 1, 1>, scalar_prefetch = 0 : i64, scratch_operands = 1 : i64, tpu.core_type = #tpu.core_type<tc>, window_params = [{transform_indices = @transform_0, window_bounds = array<i64: 128, 32>}, {transform_indices = @transform_1, window_bounds = array<i64: 1, 32>}, {transform_indices = @transform_2, window_bounds = array<i64: 1>}, {transform_indices = @transform_3, window_bounds = array<i64: 1, 128>}]} {
    %c0_i32 = arith.constant 0 : i32
    %0 = arith.cmpi eq, %arg1, %c0_i32 : i32
    %1 = arith.extui %0 : i1 to i32
    %c0_i32_0 = arith.constant 0 : i32
    %2 = arith.cmpi ne, %1, %c0_i32_0 : i32
    scf.if %2 {
      %cst_10 = arith.constant 0.000000e+00 : f32
      %16 = vector.broadcast %cst_10 : f32 to vector<1x128xf32>
      %c0_11 = arith.constant 0 : index
      %c0_12 = arith.constant 0 : index
      %17 = vector.load %arg6[%c0_11, %c0_12] : memref<1x128xf32, #tpu.memory_space<vmem>>, vector<1x128xf32>
      tpu.vector_store %arg6[%c0_11, %c0_12], %16 {strides = array<i32>} : memref<1x128xf32, #tpu.memory_space<vmem>>, vector<1x128xf32>,
    } else {
    }
    %c0 = arith.constant 0 : index
    %c0_1 = arith.constant 0 : index
    %3 = vector.load %arg2[%c0, %c0_1] : memref<128x32xf32, #tpu.memory_space<vmem>>, vector<128x32xf32>
    %c0_2 = arith.constant 0 : index
    %c0_3 = arith.constant 0 : index
    %4 = vector.load %arg3[%c0_2, %c0_3] : memref<1x32xf32, #tpu.memory_space<vmem>>, vector<1x32xf32>
    %5 = vector.broadcast %4 : vector<1x32xf32> to vector<128x32xf32>
    %6 = arith.mulf %3, %5 : vector<128x32xf32>
    %cst = arith.constant dense<0.000000e+00> : vector<128xf32>
    %7 = vector.multi_reduction <add>, %6, %cst [1] : vector<128x32xf32> to vector<128xf32>
    %8 = vector.shape_cast %7 : vector<128xf32> to vector<128x1xf32>
    %c0_4 = arith.constant 0 : index
    %c0_5 = arith.constant 0 : index
    %9 = vector.load %arg6[%c0_4, %c0_5] : memref<1x128xf32, #tpu.memory_space<vmem>>, vector<1x128xf32>
    %10 = tpu.transpose %8, [1, 0] : vector<128x1xf32> -> vector<1x128xf32>
    %11 = arith.addf %9, %10 : vector<1x128xf32>
    %c0_6 = arith.constant 0 : index
    %c0_7 = arith.constant 0 : index
    %12 = vector.load %arg6[%c0_6, %c0_7] : memref<1x128xf32, #tpu.memory_space<vmem>>, vector<1x128xf32>
    tpu.vector_store %arg6[%c0_6, %c0_7], %11 {strides = array<i32>} : memref<1x128xf32, #tpu.memory_space<vmem>>, vector<1x128xf32>,
    %c0_i32_8 = arith.constant 0 : i32
    %13 = arith.cmpi eq, %arg1, %c0_i32_8 : i32
    %14 = arith.extui %13 : i1 to i32
    %c0_i32_9 = arith.constant 0 : i32
    %15 = arith.cmpi ne, %14, %c0_i32_9 : i32
    scf.if %15 {
      %c0_10 = arith.constant 0 : index
      %c0_11 = arith.constant 0 : index
      %16 = vector.load %arg6[%c0_10, %c0_11] : memref<1x128xf32, #tpu.memory_space<vmem>>, vector<1x128xf32>
      %c0_12 = arith.constant 0 : index
      %17 = memref.load %arg4[%c0_12] : memref<1xf32, #tpu.memory_space<smem>>
      %18 = vector.broadcast %17 : f32 to vector<1x128xf32>
      %19 = arith.addf %16, %18 : vector<1x128xf32>
      %c0_13 = arith.constant 0 : index
      %c0_14 = arith.constant 0 : index
      %20 = vector.load %arg5[%c0_13, %c0_14] : memref<1x128xf32, #tpu.memory_space<vmem>>, vector<1x128xf32>
      tpu.vector_store %arg5[%c0_13, %c0_14], %19 {strides = array<i32>} : memref<1x128xf32, #tpu.memory_space<vmem>>, vector<1x128xf32>,
    } else {
    }
    return
  }
  func.func @transform_0(%arg0: i32, %arg1: i32) -> (i32, i32) {
    %c0_i32 = arith.constant 0 : i32
    return %arg0, %arg1 : i32, i32
  }
  func.func @transform_1(%arg0: i32, %arg1: i32) -> (i32, i32) {
    %c0_i32 = arith.constant 0 : i32
    %c0_i32_0 = arith.constant 0 : i32
    return %c0_i32, %arg1 : i32, i32
  }
  func.func @transform_2(%arg0: i32, %arg1: i32) -> i32 {
    %c0_i32 = arith.constant 0 : i32
    %c0_i32_0 = arith.constant 0 : i32
    return %c0_i32 : i32
  }
  func.func @transform_3(%arg0: i32, %arg1: i32) -> (i32, i32) {
    %c0_i32 = arith.constant 0 : i32
    %c0_i32_0 = arith.constant 0 : i32
    return %c0_i32, %arg0 : i32, i32
  }
}

</mosaic_0001>

<llo_original>
// kernel: tpu_custom_call.1
$region0: #{tpu_custom_call.1}
  #allocation0 [shape = 'u32[]', space=smem, size = 0x4, offset = 0x4, fixed_abs, tag = 'smem constant byte address 0x4 - core index']
  #allocation1 [shape = 'u32[72,128]{1,0:T(1,128)}', space=vmem, size = 0x9000, scoped, tag = 'internal scratch']
  #allocation2 [shape = 'f32[1,128]{1,0:T(1,128)}', space=vmem, size = 0x200, scoped, tag = 'scratch operand']
  #allocation3 [shape = 'f32[1]{0:T(128)S(6)}', space=smem, size = 0x200, scoped, tag = 'scoped memory for tpu_custom_call.1']
  %s0 = inlined_call_operand.vmem [shape: f32[2,32], index: 0, kind: input, shape index: {}]
  %s1 = inlined_call_operand.hbm [shape: f32[1,32], index: 1, kind: input, shape index: {}]
  %s2 = inlined_call_operand.<no memory space> [shape: f32[1], index: 2, kind: input, shape index: {}]
  %s3 = inlined_call_operand.hbm [shape: f32[1,128], index: 3, kind: output, shape index: {}]
  %s4 = sld [smem:[#allocation0]]
  $region34: #{tpu_custom_call.1} parent=0
    _
  %s6 = ssub.s32 1, %s4
  %s7 = scalar_select 0, %s6, %s4
  %8 = sst [smem:[#allocation3]] %s2
  $region1: #{tpu_custom_call.1} parent=0
    #allocation4 [shape = 'u8[512]{0}', space=vmem, size = 0x400, scoped, tag = 'input window, operand 1, single buffered']
    #allocation5 [shape = 's32[1]{0}', space=sflag, size = 0x4, scoped, tag = 'scoped memory for tpu_custom_call.1']
    #allocation6 [shape = 's32[1]{0}', space=sflag, size = 0x4, scoped, tag = 'scoped memory for tpu_custom_call.1']
    #allocation7 [shape = 'u8[512]{0}', space=vmem, size = 0x400, scoped, tag = 'output window, operand 0, single buffered']
    %9 = vsyncpa [#allocation5], 0
    %10 = vsyncpa [#allocation6], 0
    // Predicated region
    $region2: #{tpu_custom_call.1} parent=1 // pred_check
      _
    $region3: #{tpu_custom_call.1} parent=1 // pred_check_branch
      %12 = sbr.rel (0) target = $region5
    $region4: #{tpu_custom_call.1} parent=1 // pred_region
      _
    $region5: #{tpu_custom_call.1} parent=1 // pred_fallthru
      _
    // Predicated region
    $region6: #{tpu_custom_call.1} parent=1 // pred_check
      _
    $region7: #{tpu_custom_call.1} parent=1 // pred_check_branch
      %14 = sbr.rel (0) target = $region9
    $region8: #{tpu_custom_call.1} parent=1 // pred_region
      %16 = vsyncadd [#allocation5], 0
      %s18 = sshll.u32 %s1, 4
      %s19 = int_to_ptr.hbm [resolvable:$true] %s18
      %s20 = sshll.u32 [#allocation4], 4
      %s21 = int_to_ptr.vmem [resolvable:$true] %s20
      %23 = dma.hbm_to_vmem [thread:$0]  %s19, 16, %s21, [#allocation5]
    $region9: #{tpu_custom_call.1} parent=1 // pred_fallthru
      _
    // Predicated region
    $region10: #{tpu_custom_call.1} parent=1 // pred_check
      _
    $region11: #{tpu_custom_call.1} parent=1 // pred_check_branch
      %25 = sbr.rel (0) target = $region13
    $region12: #{tpu_custom_call.1} parent=1 // pred_region
      _
    $region13: #{tpu_custom_call.1} parent=1 // pred_fallthru
      _
    // Predicated region
    $region14: #{tpu_custom_call.1} parent=1 // pred_check
      _
    $region15: #{tpu_custom_call.1} parent=1 // pred_check_branch
      %27 = sbr.rel (0) target = $region17
    $region16: #{tpu_custom_call.1} parent=1 // pred_region
      %29 = dma.done [#allocation5], 16
    $region17: #{tpu_custom_call.1} parent=1 // pred_fallthru
      _
    %p30 = scmp.eq.s32.totalorder 0, 0
    // Predicated region
    $region18: #{tpu_custom_call.1} parent=1 // pred_check
      %p31 = pneg %p30
    $region19: #{tpu_custom_call.1} parent=1 // pred_check_branch
      %33 = sbr.rel (%p31) target = $region21
    $region20: #{tpu_custom_call.1} parent=1 // pred_region
      %34 = vst [vmem:[#allocation2] sm:$0x1] 0.0
    $region21: #{tpu_custom_call.1} parent=1 // pred_fallthru
      _
    %v35 = vld [vmem:[%s0] sm:$0xff]
    %v36 = vld [vmem:[%s0 + $0x8] sm:$0xff]
    %v37 = vld [vmem:[%s0 + $0x10] sm:$0xff]
    %v38 = vld [vmem:[%s0 + $0x18] sm:$0xff]
    %v39 = vld [vmem:[%s0 + $0x20] sm:$0xff]
    %v40 = vld [vmem:[%s0 + $0x28] sm:$0xff]
    %v41 = vld [vmem:[%s0 + $0x30] sm:$0xff]
    %v42 = vld [vmem:[%s0 + $0x38] sm:$0xff]
    %v43 = vld [vmem:[%s0 + $0x40] sm:$0xff]
    %v44 = vld [vmem:[%s0 + $0x48] sm:$0xff]
    %v45 = vld [vmem:[%s0 + $0x50] sm:$0xff]
    %v46 = vld [vmem:[%s0 + $0x58] sm:$0xff]
    %v47 = vld [vmem:[%s0 + $0x60] sm:$0xff]
    %v48 = vld [vmem:[%s0 + $0x68] sm:$0xff]
    %v49 = vld [vmem:[%s0 + $0x70] sm:$0xff]
    %v50 = vld [vmem:[%s0 + $0x78] sm:$0xff]
    %v51 = vld [vmem:[#allocation4] sm:$0x1]
    %v53 = vperm.slane %v51, 0
    %v55 = vmul.f32 %v35, %v53
    %v56 = vmul.f32 %v36, %v53
    %v57 = vmul.f32 %v37, %v53
    %v58 = vmul.f32 %v38, %v53
    %v59 = vmul.f32 %v39, %v53
    %v60 = vmul.f32 %v40, %v53
    %v61 = vmul.f32 %v41, %v53
    %v62 = vmul.f32 %v42, %v53
    %v63 = vmul.f32 %v43, %v53
    %v64 = vmul.f32 %v44, %v53
    %v65 = vmul.f32 %v45, %v53
    %v66 = vmul.f32 %v46, %v53
    %v67 = vmul.f32 %v47, %v53
    %v68 = vmul.f32 %v48, %v53
    %v69 = vmul.f32 %v49, %v53
    %v70 = vmul.f32 %v50, %v53
    %vm71 = vcmask 261120
    %v72 = vsel %vm71, %v55, 0.0
    %73 = vadd.xlane.f32.xlu0 %v72
    %v74 = vpop.xlane.xlu0 %73
    %v75 = vsel %vm71, %v56, 0.0
    %76 = vadd.xlane.f32.xlu0 %v75
    %v77 = vpop.xlane.xlu0 %76
    %v78 = vsel %vm71, %v57, 0.0
    %79 = vadd.xlane.f32.xlu0 %v78
    %v80 = vpop.xlane.xlu0 %79
    %v81 = vsel %vm71, %v58, 0.0
    %82 = vadd.xlane.f32.xlu0 %v81
    %v83 = vpop.xlane.xlu0 %82
    %v84 = vsel %vm71, %v59, 0.0
    %85 = vadd.xlane.f32.xlu0 %v84
    %v86 = vpop.xlane.xlu0 %85
    %v87 = vsel %vm71, %v60, 0.0
    %88 = vadd.xlane.f32.xlu0 %v87
    %v89 = vpop.xlane.xlu0 %88
    %v90 = vsel %vm71, %v61, 0.0
    %91 = vadd.xlane.f32.xlu0 %v90
    %v92 = vpop.xlane.xlu0 %91
    %v93 = vsel %vm71, %v62, 0.0
    %94 = vadd.xlane.f32.xlu0 %v93
    %v95 = vpop.xlane.xlu0 %94
    %v96 = vsel %vm71, %v63, 0.0
    %97 = vadd.xlane.f32.xlu0 %v96
    %v98 = vpop.xlane.xlu0 %97
    %v99 = vsel %vm71, %v64, 0.0
    %100 = vadd.xlane.f32.xlu0 %v99
    %v101 = vpop.xlane.xlu0 %100
    %v102 = vsel %vm71, %v65, 0.0
    %103 = vadd.xlane.f32.xlu0 %v102
    %v104 = vpop.xlane.xlu0 %103
    %v105 = vsel %vm71, %v66, 0.0
    %106 = vadd.xlane.f32.xlu0 %v105
    %v107 = vpop.xlane.xlu0 %106
    %v108 = vsel %vm71, %v67, 0.0
    %109 = vadd.xlane.f32.xlu0 %v108
    %v110 = vpop.xlane.xlu0 %109
    %v111 = vsel %vm71, %v68, 0.0
    %112 = vadd.xlane.f32.xlu0 %v111
    %v113 = vpop.xlane.xlu0 %112
    %v114 = vsel %vm71, %v69, 0.0
    %115 = vadd.xlane.f32.xlu0 %v114
    %v116 = vpop.xlane.xlu0 %115
    %v117 = vsel %vm71, %v70, 0.0
    %118 = vadd.xlane.f32.xlu0 %v117
    %v119 = vpop.xlane.xlu0 %118
    %v120 = vld [vmem:[#allocation2] sm:$0x1]
    %121 = vxpose.xlu0.b32.start [1/16] %v74, 128
    %122 = vxpose.xlu0.b32.cont [2/16] %v77, 128
    %123 = vxpose.xlu0.b32.cont [3/16] %v80, 128
    %124 = vxpose.xlu0.b32.cont [4/16] %v83, 128
    %125 = vxpose.xlu0.b32.cont [5/16] %v86, 128
    %126 = vxpose.xlu0.b32.cont [6/16] %v89, 128
    %127 = vxpose.xlu0.b32.cont [7/16] %v92, 128
    %128 = vxpose.xlu0.b32.cont [8/16] %v95, 128
    %129 = vxpose.xlu0.b32.cont [9/16] %v98, 128
    %130 = vxpose.xlu0.b32.cont [10/16] %v101, 128
    %131 = vxpose.xlu0.b32.cont [11/16] %v104, 128
    %132 = vxpose.xlu0.b32.cont [12/16] %v107, 128
    %133 = vxpose.xlu0.b32.cont [13/16] %v110, 128
    %134 = vxpose.xlu0.b32.cont [14/16] %v113, 128
    %135 = vxpose.xlu0.b32.cont [15/16] %v116, 128
    %136 = vxpose.xlu0.b32.end [16/16] %v119, 128
    %v137 = vpop.trf.xlu0
    %v138 = vpop.trf.xlu0
    %v139 = vpop.trf.xlu0
    %v140 = vpop.trf.xlu0
    %v141 = vpop.trf.xlu0
    %v142 = vpop.trf.xlu0
    %v143 = vpop.trf.xlu0
    %v144 = vpop.trf.xlu0
    %v145 = vpop.trf.xlu0
    %v146 = vpop.trf.xlu0
    %v147 = vpop.trf.xlu0
    %v148 = vpop.trf.xlu0
    %v149 = vpop.trf.xlu0
    %v150 = vpop.trf.xlu0
    %v151 = vpop.trf.xlu0
    %v152 = vpop.trf.xlu0
    %v153 = vadd.f32 %v120, %v137
    %154 = vst [vmem:[#allocation2] sm:$0x1] %v153
    // Predicated region
    $region22: #{tpu_custom_call.1} parent=1 // pred_check
      %p155 = pneg %p30
    $region23: #{tpu_custom_call.1} parent=1 // pred_check_branch
      %157 = sbr.rel (%p155) target = $region25
    $region24: #{tpu_custom_call.1} parent=1 // pred_region
      %v158 = vld [vmem:[#allocation2] sm:$0x1]
      %s159 = sld [smem:[#allocation3]]
      %v160 = vstv %s159
      %v161 = vadd.f32 %v158, %v160
      %162 = vst [vmem:[#allocation7] sm:$0x1] %v161
    $region25: #{tpu_custom_call.1} parent=1 // pred_fallthru
      _
    // Predicated region
    $region26: #{tpu_custom_call.1} parent=1 // pred_check
      _
    $region27: #{tpu_custom_call.1} parent=1 // pred_check_branch
      %164 = sbr.rel (0) target = $region29
    $region28: #{tpu_custom_call.1} parent=1 // pred_region
      %166 = vsyncadd [#allocation6], 0
      %s168 = sshll.u32 [#allocation7], 4
      %s169 = int_to_ptr.vmem [resolvable:$true] %s168
      %s170 = sshll.u32 %s3, 4
      %s171 = int_to_ptr.hbm [resolvable:$true] %s170
      %173 = dma.vmem_to_hbm [thread:$0]  %s169, 16, %s171, [#allocation6]
    $region29: #{tpu_custom_call.1} parent=1 // pred_fallthru
      _
    // Predicated region
    $region30: #{tpu_custom_call.1} parent=1 // pred_check
      _
    $region31: #{tpu_custom_call.1} parent=1 // pred_check_branch
      %175 = sbr.rel (0) target = $region33
    $region32: #{tpu_custom_call.1} parent=1 // pred_region
      %177 = dma.done [#allocation6], 16
    $region33: #{tpu_custom_call.1} parent=1 // pred_fallthru
      _
    %178 = vsyncpa [#allocation5], 1
    %179 = vsyncpa [#allocation6], 1

</llo_original>
